<compile_context>
chip_gen: v7x
topology: tpu7x:2x2x1
jax: 0.10.0
libtpu: 0.0.40
codegen_flags: <defaults>
</compile_context>

<pallas_src>
import functools

import jax
import jax.numpy as jnp
from jax.experimental import pallas as pl
from jax.experimental.pallas import tpu as pltpu

EPS = 1e-5
_VMEM_LIMIT = 48 * 1024 * 1024        # explicit scoped-VMEM limit (fits v7x 64 MiB physical)
_TILE_VMEM_BUDGET = 20 * 1024 * 1024  # target per-step double-buffered footprint
_TILE_CAP = 8192                      # lane-dim cap even when VMEM would allow more


def _pick_m_tile(hw: int, per_col_bytes: int) -> int:
    """Largest lane-dense M tile whose double-buffered footprint fits the budget."""
    limit = min(_TILE_CAP, max(128, _TILE_VMEM_BUDGET // max(per_col_bytes, 1)))
    if hw <= limit:
        return hw                      # full spatial extent in one tile
    limit = (limit // 128) * 128
    for t in range(limit, 127, -128):  # prefer an exact divisor -> no ragged tile
        if hw % t == 0:
            return t
    return limit                       # ragged last tile; stats are masked in-kernel


# ---------------------------------------------------------------------------
# pass 1: z = W1 @ x   and bn1 sum / sum-of-squares accumulation
# ---------------------------------------------------------------------------
def _down_kernel(x_ref, w1_ref, z_ref, s_ref, ss_ref, *, hw, need_mask, n_inner, n_tiles):
    # x_ref : (Cin, TM)  one sample's pixel tile, channels on sublanes
    # w1_ref: (Cd, Cin)  down_sampler weight (constant index_map -> resident)
    # z_ref : (Cd, TM)   bottleneck activations (activation dtype)
    # s_ref : (Cd, 1), ss_ref: (Cd, 1)  bn1 running sum / sumsq (f32, per (sample, m_outer))
    k = pl.program_id(2)

    z = jnp.dot(w1_ref[...], x_ref[...], preferred_element_type=jnp.float32)
    z_ref[...] = z.astype(z_ref.dtype)

    @pl.when(k == 0)
    def _():
        s_ref[...] = jnp.zeros_like(s_ref)
        ss_ref[...] = jnp.zeros_like(ss_ref)

    def accum(zv):
        s_ref[...] += jnp.sum(zv, axis=-1, keepdims=True)
        ss_ref[...] += jnp.sum(zv * zv, axis=-1, keepdims=True)

    if need_mask:
        # Only the globally-last tile is ragged; keep the steady state unmasked.
        gidx = pl.program_id(1) * n_inner + k

        @pl.when(gidx != n_tiles - 1)
        def _():
            accum(z)

        @pl.when(gidx == n_tiles - 1)
        def _():
            tm = z.shape[-1]
            lane = jax.lax.broadcasted_iota(jnp.int32, z.shape, 1)
            accum(jnp.where((gidx * tm + lane) < hw, z, 0.0))
    else:
        accum(z)


# ---------------------------------------------------------------------------
# pass 2: a = relu(bn1(z));  accumulate sum(a) and Gram G = a @ a^T
#         (no full-size output; bn2 stats are reconstructed from these in JAX)
# ---------------------------------------------------------------------------
def _stats_kernel(z_ref, a1_ref, b1_ref, sa_ref, g_ref, *, hw, need_mask, n_inner, n_tiles):
    # z_ref : (Cd, TM);  a1/b1: (Cd, 1) folded bn1 scale/shift (f32)
    # sa_ref: (Cd, 1)  running sum of a;  g_ref: (Cd, Cd) running Gram of a
    k = pl.program_id(2)

    a = jnp.maximum(z_ref[...].astype(jnp.float32) * a1_ref[...] + b1_ref[...], 0.0)

    @pl.when(k == 0)
    def _():
        sa_ref[...] = jnp.zeros_like(sa_ref)
        g_ref[...] = jnp.zeros_like(g_ref)

    def accum(av):
        sa_ref[...] += jnp.sum(av, axis=-1, keepdims=True)
        # Gram contracts over the pixel axis (depth TM), so the MXU is well fed
        # even though the (Cd, Cd) result is tiny.
        g_ref[...] += jax.lax.dot_general(
            av, av, (((1,), (1,)), ((), ())), preferred_element_type=jnp.float32)

    if need_mask:
        gidx = pl.program_id(1) * n_inner + k

        @pl.when(gidx != n_tiles - 1)
        def _():
            accum(a)

        @pl.when(gidx == n_tiles - 1)
        def _():
            tm = a.shape[-1]
            lane = jax.lax.broadcasted_iota(jnp.int32, a.shape, 1)
            accum(jnp.where((gidx * tm + lane) < hw, a, 0.0))
    else:
        accum(a)


# ---------------------------------------------------------------------------
# pass 3: y = bn2(W2 @ relu(bn1(z)))   (fully parallel; recomputes relu(bn1(z))
#         instead of round-tripping a Cout-sized intermediate through HBM)
# ---------------------------------------------------------------------------
def _up_kernel(z_ref, a1_ref, b1_ref, w2_ref, a2_ref, b2_ref, y_ref):
    a = jnp.maximum(z_ref[...].astype(jnp.float32) * a1_ref[...] + b1_ref[...], 0.0)
    # NOTE: contraction depth is only Cd (= Cin/16): this matmul is MXU
    # latency- not throughput-bound, but the pass stays HBM-bound overall.
    out = jnp.dot(w2_ref[...], a, preferred_element_type=jnp.float32)
    y_ref[...] = (out * a2_ref[...] + b2_ref[...]).astype(y_ref.dtype)


def vision_adapter_bottleneck(x_nchw, w1, g1, b1, w2, g2, b2):
    """Bottleneck VisionAdapter forward (training-mode BatchNorm).

    x_nchw: (N, Cin, H, W); w1: (Cd, Cin) [from torch (Cd,Cin,1,1)];
    w2: (Cout, Cd); g*/b*: BatchNorm affine params.  Returns (N, Cout, H, W).
    """
    n, cin, h, w = x_nchw.shape
    cd = w1.shape[0]
    cout = w2.shape[0]
    hw = h * w
    count = n * hw                       # BN population size per channel
    fdt = jnp.float32
    act_dt = x_nchw.dtype
    act_bytes = jnp.dtype(act_dt).itemsize

    # Widest per-pixel-column double-buffered footprint:
    #   pass 1: x (Cin) in + z (Cd) out;  pass 3: z (Cd) in + y (Cout) out.
    per_col = 2 * (max(cin, cout) + cd) * act_bytes
    tm = _pick_m_tile(hw, per_col)
    m_tiles = pl.cdiv(hw, tm)
    need_mask = (hw % tm) != 0

    # Split M tiles into (outer "parallel", inner "arbitrary") so both v7x
    # TensorCores have work when the batch axis alone cannot be split evenly.
    if n % 2 == 1 and m_tiles % 2 == 0:
        mo, mi = 2, m_tiles // 2
    else:
        mo, mi = 1, m_tiles
    grid = (n, mo, mi)

    # Free reshape (no transpose): channels -> sublanes, pixels -> lanes.
    x3 = x_nchw.reshape(n, cin, hw)

    xz_map = lambda i, j, k, NI=mi: (i, 0, j * NI + k)
    stat_map = lambda i, j, k: (i, j, 0, 0)
    const2_map = lambda i, j, k: (0, 0)

    # ---- pass 1: down-projection + bn1 statistics -------------------------
    z3, s1, ss1 = pl.pallas_call(
        functools.partial(_down_kernel, hw=hw, need_mask=need_mask,
                          n_inner=mi, n_tiles=m_tiles),
        grid=grid,
        in_specs=[
            pl.BlockSpec((None, cin, tm), xz_map),
            pl.BlockSpec((cd, cin), const2_map),
        ],
        out_specs=(
            pl.BlockSpec((None, cd, tm), xz_map),
            pl.BlockSpec((None, None, cd, 1), stat_map),
            pl.BlockSpec((None, None, cd, 1), stat_map),
        ),
        out_shape=(
            jax.ShapeDtypeStruct((n, cd, hw), act_dt),
            jax.ShapeDtypeStruct((n, mo, cd, 1), fdt),
            jax.ShapeDtypeStruct((n, mo, cd, 1), fdt),
        ),
        compiler_params=pltpu.CompilerParams(
            dimension_semantics=("parallel", "parallel", "arbitrary"),
            vmem_limit_bytes=_VMEM_LIMIT),
        cost_estimate=pl.CostEstimate(
            flops=2 * count * cin * cd + 3 * count * cd,
            transcendentals=0,
            bytes_accessed=count * (cin + cd) * act_bytes),
    )(x3, w1)

    # bn1 stats -> folded per-channel scale/shift (tiny; plain JAX, f32)
    sum1 = jnp.sum(s1, axis=(0, 1)).reshape(cd)
    sumsq1 = jnp.sum(ss1, axis=(0, 1)).reshape(cd)
    mean1 = sum1 / count
    var1 = jnp.maximum(sumsq1 / count - mean1 * mean1, 0.0)
    scale1 = g1.astype(fdt) * jax.lax.rsqrt(var1 + EPS)
    shift1 = b1.astype(fdt) - mean1 * scale1

    # ---- pass 2: bn2 statistics via sum(a) and the (Cd, Cd) Gram -----------
    sa, gram = pl.pallas_call(
        functools.partial(_stats_kernel, hw=hw, need_mask=need_mask,
                          n_inner=mi, n_tiles=m_tiles),
        grid=grid,
        in_specs=[
            pl.BlockSpec((None, cd, tm), xz_map),
            pl.BlockSpec((cd, 1), const2_map),
            pl.BlockSpec((cd, 1), const2_map),
        ],
        out_specs=(
            pl.BlockSpec((None, None, cd, 1), stat_map),
            pl.BlockSpec((None, None, cd, cd), stat_map),
        ),
        out_shape=(
            jax.ShapeDtypeStruct((n, mo, cd, 1), fdt),
            jax.ShapeDtypeStruct((n, mo, cd, cd), fdt),
        ),
        compiler_params=pltpu.CompilerParams(
            dimension_semantics=("parallel", "parallel", "arbitrary"),
            vmem_limit_bytes=_VMEM_LIMIT),
        cost_estimate=pl.CostEstimate(
            flops=count * (4 * cd + 2 * cd * cd),
            transcendentals=0,
            bytes_accessed=count * cd * act_bytes),
    )(z3, scale1.reshape(cd, 1), shift1.reshape(cd, 1))

    # bn2 stats without materializing out:
    #   sum(out)    = W2 @ sum(a)
    #   sumsq(out)  = diag(W2 @ G @ W2^T)
    sum_a = jnp.sum(sa, axis=(0, 1)).reshape(cd)
    g_tot = jnp.sum(gram, axis=(0, 1))                 # (Cd, Cd)
    w2f = w2.astype(fdt)
    sum2 = w2f @ sum_a                                 # (Cout,)
    sumsq2 = jnp.sum((w2f @ g_tot) * w2f, axis=1)      # (Cout,)
    mean2 = sum2 / count
    var2 = jnp.maximum(sumsq2 / count - mean2 * mean2, 0.0)
    scale2 = g2.astype(fdt) * jax.lax.rsqrt(var2 + EPS)
    shift2 = b2.astype(fdt) - mean2 * scale2

    # ---- pass 3: y = bn2(W2 @ relu(bn1(z)))  (fully parallel) ---------------
    y3 = pl.pallas_call(
        _up_kernel,
        grid=grid,
        in_specs=[
            pl.BlockSpec((None, cd, tm), xz_map),
            pl.BlockSpec((cd, 1), const2_map),
            pl.BlockSpec((cd, 1), const2_map),
            pl.BlockSpec((cout, cd), const2_map),
            pl.BlockSpec((cout, 1), const2_map),
            pl.BlockSpec((cout, 1), const2_map),
        ],
        out_specs=pl.BlockSpec((None, cout, tm), xz_map),
        out_shape=jax.ShapeDtypeStruct((n, cout, hw), act_dt),
        compiler_params=pltpu.CompilerParams(
            dimension_semantics=("parallel", "parallel", "parallel"),
            vmem_limit_bytes=_VMEM_LIMIT),
        cost_estimate=pl.CostEstimate(
            flops=2 * count * cd * cout + count * (3 * cd + 2 * cout),
            transcendentals=0,
            bytes_accessed=count * (cd + cout) * act_bytes),
    )(z3, scale1.reshape(cd, 1), shift1.reshape(cd, 1), w2,
      scale2.reshape(cout, 1), shift2.reshape(cout, 1))

    # Free reshape back to NCHW (no transpose needed).
    return y3.reshape(n, cout, h, w)


def _reference(x_nchw, w1, g1, b1, w2, g2, b2):
    """Plain-JAX reference mirroring the PyTorch forward."""
    def conv1x1(x, wt):  # wt: (Cout, Cin)
        return jnp.einsum('nchw,oc->nohw', x, wt)

    def bn(x, g, b):
        mean = jnp.mean(x, axis=(0, 2, 3), keepdims=True)
        var = jnp.mean((x - mean) ** 2, axis=(0, 2, 3), keepdims=True)
        return (x - mean) * jax.lax.rsqrt(var + EPS) * g[None, :, None, None] \
            + b[None, :, None, None]

    z = conv1x1(x_nchw, w1)
    z = bn(z, g1, b1)
    z = jnp.maximum(z, 0.0)
    out = conv1x1(z, w2)
    return bn(out, g2, b2)


if __name__ == "__main__":
    # VisionAdapter(input_dim=64, output_dim=64, adapter_kind='bottleneck',
    #               reduction_factor=16, use_bn=True)
    N, Cin, H, W = 2, 64, 8, 8
    reduction_factor = 16
    Cd = Cin // reduction_factor      # 4
    Cout = 64

    key = jax.random.PRNGKey(0)
    kx, kw1, kw2, kg1, kb1, kg2, kb2 = jax.random.split(key, 7)

    x = jax.random.normal(kx, (N, Cin, H, W), dtype=jnp.float32)
    # Conv2d weights (1x1 kernels, bias=False): stored as (Cout, Cin)
    w1 = jax.random.normal(kw1, (Cd, Cin), dtype=jnp.float32) * 0.1
    w2 = jax.random.normal(kw2, (Cout, Cd), dtype=jnp.float32) * 0.1
    # BatchNorm affine params (non-trivial to exercise the math)
    g1 = 1.0 + 0.1 * jax.random.normal(kg1, (Cd,), dtype=jnp.float32)
    b1 = 0.1 * jax.random.normal(kb1, (Cd,), dtype=jnp.float32)
    g2 = 1.0 + 0.1 * jax.random.normal(kg2, (Cout,), dtype=jnp.float32)
    b2 = 0.1 * jax.random.normal(kb2, (Cout,), dtype=jnp.float32)

    out = vision_adapter_bottleneck(x, w1, g1, b1, w2, g2, b2)
    out = jax.block_until_ready(out)

    ref = _reference(x, w1, g1, b1, w2, g2, b2)
    assert out.shape == (N, Cout, H, W)
    assert jnp.allclose(out, ref, atol=5e-4, rtol=5e-4), "mismatch vs reference"

    print("KERNEL_OK")
</pallas_src>

<mosaic_0001>
module attributes {stable_mosaic.version = 11 : i64} {
  func.func @_down_kernel(%arg0: i32, %arg1: i32, %arg2: i32, %arg3: memref<1x64x64xf32, #tpu.memory_space<vmem>>, %arg4: memref<4x64xf32, #tpu.memory_space<vmem>>, %arg5: memref<1x4x64xf32, #tpu.memory_space<vmem>>, %arg6: memref<1x1x4x1xf32, #tpu.memory_space<vmem>>, %arg7: memref<1x1x4x1xf32, #tpu.memory_space<vmem>>) attributes {dimension_semantics = [#tpu.dimension_semantics<parallel>, #tpu.dimension_semantics<parallel>, #tpu.dimension_semantics<arbitrary>], iteration_bounds = array<i64: 2, 1, 1>, scalar_prefetch = 0 : i64, scratch_operands = 0 : i64, tpu.core_type = #tpu.core_type<tc>, window_params = [{transform_indices = @transform_0, window_bounds = array<i64: 1, 64, 64>}, {pipeline_mode = #tpu.pipeline_mode<synchronous>, transform_indices = @transform_1, window_bounds = array<i64: 4, 64>}, {transform_indices = @transform_2, window_bounds = array<i64: 1, 4, 64>}, {transform_indices = @transform_3, window_bounds = array<i64: 1, 1, 4, 1>}, {transform_indices = @transform_4, window_bounds = array<i64: 1, 1, 4, 1>}]} {
    %c0 = arith.constant 0 : index
    %c0_0 = arith.constant 0 : index
    %0 = vector.load %arg4[%c0, %c0_0] : memref<4x64xf32, #tpu.memory_space<vmem>>, vector<4x64xf32>
    %c0_1 = arith.constant 0 : index
    %c0_2 = arith.constant 0 : index
    %c0_3 = arith.constant 0 : index
    %1 = vector.load %arg3[%c0_1, %c0_2, %c0_3] : memref<1x64x64xf32, #tpu.memory_space<vmem>>, vector<1x64x64xf32>
    %2 = vector.shape_cast %1 : vector<1x64x64xf32> to vector<64x64xf32>
    %cst = arith.constant dense<0.000000e+00> : vector<4x64xf32>
    %3 = tpu.matmul %0, %2, %cst {dimension_numbers = #tpu.dot_dimension_numbers<[1], [0], [0], [1], [0, 0, 1, 1], [], []>} : vector<4x64xf32>, vector<64x64xf32>, vector<4x64xf32> -> vector<4x64xf32>
    %c0_4 = arith.constant 0 : index
    %c0_5 = arith.constant 0 : index
    %c0_6 = arith.constant 0 : index
    %4 = vector.load %arg5[%c0_4, %c0_5, %c0_6] : memref<1x4x64xf32, #tpu.memory_space<vmem>>, vector<1x4x64xf32>
    %5 = vector.shape_cast %4 : vector<1x4x64xf32> to vector<4x64xf32>
    %6 = vector.shape_cast %3 : vector<4x64xf32> to vector<1x4x64xf32>
    tpu.vector_store %arg5[%c0_4, %c0_5, %c0_6], %6 {strides = array<i32>} : memref<1x4x64xf32, #tpu.memory_space<vmem>>, vector<1x4x64xf32>,
    %c0_i32 = arith.constant 0 : i32
    %7 = arith.cmpi eq, %arg2, %c0_i32 : i32
    %8 = arith.extui %7 : i1 to i32
    %c0_i32_7 = arith.constant 0 : i32
    %9 = arith.cmpi ne, %8, %c0_i32_7 : i32
    scf.if %9 {
      %cst_26 = arith.constant 0.000000e+00 : f32
      %27 = vector.broadcast %cst_26 : f32 to vector<4x1xf32>
      %c0_27 = arith.constant 0 : index
      %c0_28 = arith.constant 0 : index
      %c0_29 = arith.constant 0 : index
      %c0_30 = arith.constant 0 : index
      %28 = vector.load %arg6[%c0_27, %c0_28, %c0_29, %c0_30] : memref<1x1x4x1xf32, #tpu.memory_space<vmem>>, vector<1x1x4x1xf32>
      %29 = vector.shape_cast %28 : vector<1x1x4x1xf32> to vector<4x1xf32>
      %30 = vector.shape_cast %27 : vector<4x1xf32> to vector<1x1x4x1xf32>
      tpu.vector_store %arg6[%c0_27, %c0_28, %c0_29, %c0_30], %30 {strides = array<i32>} : memref<1x1x4x1xf32, #tpu.memory_space<vmem>>, vector<1x1x4x1xf32>,
      %cst_31 = arith.constant 0.000000e+00 : f32
      %31 = vector.broadcast %cst_31 : f32 to vector<4x1xf32>
      %c0_32 = arith.constant 0 : index
      %c0_33 = arith.constant 0 : index
      %c0_34 = arith.constant 0 : index
      %c0_35 = arith.constant 0 : index
      %32 = vector.load %arg7[%c0_32, %c0_33, %c0_34, %c0_35] : memref<1x1x4x1xf32, #tpu.memory_space<vmem>>, vector<1x1x4x1xf32>
      %33 = vector.shape_cast %32 : vector<1x1x4x1xf32> to vector<4x1xf32>
      %34 = vector.shape_cast %31 : vector<4x1xf32> to vector<1x1x4x1xf32>
      tpu.vector_store %arg7[%c0_32, %c0_33, %c0_34, %c0_35], %34 {strides = array<i32>} : memref<1x1x4x1xf32, #tpu.memory_space<vmem>>, vector<1x1x4x1xf32>,
    } else {
    }
    %c0_8 = arith.constant 0 : index
    %c0_9 = arith.constant 0 : index
    %c0_10 = arith.constant 0 : index
    %c0_11 = arith.constant 0 : index
    %10 = vector.load %arg6[%c0_8, %c0_9, %c0_10, %c0_11] : memref<1x1x4x1xf32, #tpu.memory_space<vmem>>, vector<1x1x4x1xf32>
    %11 = vector.shape_cast %10 : vector<1x1x4x1xf32> to vector<4x1xf32>
    %cst_12 = arith.constant dense<0.000000e+00> : vector<4xf32>
    %12 = vector.multi_reduction <add>, %3, %cst_12 [1] : vector<4x64xf32> to vector<4xf32>
    %13 = vector.shape_cast %12 : vector<4xf32> to vector<4x1xf32>
    %14 = arith.addf %11, %13 : vector<4x1xf32>
    %c0_13 = arith.constant 0 : index
    %c0_14 = arith.constant 0 : index
    %c0_15 = arith.constant 0 : index
    %c0_16 = arith.constant 0 : index
    %15 = vector.load %arg6[%c0_13, %c0_14, %c0_15, %c0_16] : memref<1x1x4x1xf32, #tpu.memory_space<vmem>>, vector<1x1x4x1xf32>
    %16 = vector.shape_cast %15 : vector<1x1x4x1xf32> to vector<4x1xf32>
    %17 = vector.shape_cast %14 : vector<4x1xf32> to vector<1x1x4x1xf32>
    tpu.vector_store %arg6[%c0_13, %c0_14, %c0_15, %c0_16], %17 {strides = array<i32>} : memref<1x1x4x1xf32, #tpu.memory_space<vmem>>, vector<1x1x4x1xf32>,
    %c0_17 = arith.constant 0 : index
    %c0_18 = arith.constant 0 : index
    %c0_19 = arith.constant 0 : index
    %c0_20 = arith.constant 0 : index
    %18 = vector.load %arg7[%c0_17, %c0_18, %c0_19, %c0_20] : memref<1x1x4x1xf32, #tpu.memory_space<vmem>>, vector<1x1x4x1xf32>
    %19 = vector.shape_cast %18 : vector<1x1x4x1xf32> to vector<4x1xf32>
    %20 = arith.mulf %3, %3 : vector<4x64xf32>
    %cst_21 = arith.constant dense<0.000000e+00> : vector<4xf32>
    %21 = vector.multi_reduction <add>, %20, %cst_21 [1] : vector<4x64xf32> to vector<4xf32>
    %22 = vector.shape_cast %21 : vector<4xf32> to vector<4x1xf32>
    %23 = arith.addf %19, %22 : vector<4x1xf32>
    %c0_22 = arith.constant 0 : index
    %c0_23 = arith.constant 0 : index
    %c0_24 = arith.constant 0 : index
    %c0_25 = arith.constant 0 : index
    %24 = vector.load %arg7[%c0_22, %c0_23, %c0_24, %c0_25] : memref<1x1x4x1xf32, #tpu.memory_space<vmem>>, vector<1x1x4x1xf32>
    %25 = vector.shape_cast %24 : vector<1x1x4x1xf32> to vector<4x1xf32>
    %26 = vector.shape_cast %23 : vector<4x1xf32> to vector<1x1x4x1xf32>
    tpu.vector_store %arg7[%c0_22, %c0_23, %c0_24, %c0_25], %26 {strides = array<i32>} : memref<1x1x4x1xf32, #tpu.memory_space<vmem>>, vector<1x1x4x1xf32>,
    return
  }
  func.func @transform_0(%arg0: i32, %arg1: i32, %arg2: i32) -> (i32, i32, i32) {
    %c1_i32 = arith.constant 1 : i32
    %0 = arith.muli %arg1, %c1_i32 : i32
    %1 = arith.addi %0, %arg2 : i32
    %c0_i32 = arith.constant 0 : i32
    %c0_i32_0 = arith.constant 0 : i32
    return %arg0, %c0_i32, %1 : i32, i32, i32
  }
  func.func @transform_1(%arg0: i32, %arg1: i32, %arg2: i32) -> (i32, i32) {
    %c0_i32 = arith.constant 0 : i32
    %c0_i32_0 = arith.constant 0 : i32
    %c0_i32_1 = arith.constant 0 : i32
    return %c0_i32, %c0_i32_0 : i32, i32
  }
  func.func @transform_2(%arg0: i32, %arg1: i32, %arg2: i32) -> (i32, i32, i32) {
    %c1_i32 = arith.constant 1 : i32
    %0 = arith.muli %arg1, %c1_i32 : i32
    %1 = arith.addi %0, %arg2 : i32
    %c0_i32 = arith.constant 0 : i32
    %c0_i32_0 = arith.constant 0 : i32
    return %arg0, %c0_i32, %1 : i32, i32, i32
  }
  func.func @transform_3(%arg0: i32, %arg1: i32, %arg2: i32) -> (i32, i32, i32, i32) {
    %c0_i32 = arith.constant 0 : i32
    %c0_i32_0 = arith.constant 0 : i32
    %c0_i32_1 = arith.constant 0 : i32
    return %arg0, %arg1, %c0_i32, %c0_i32_0 : i32, i32, i32, i32
  }
  func.func @transform_4(%arg0: i32, %arg1: i32, %arg2: i32) -> (i32, i32, i32, i32) {
    %c0_i32 = arith.constant 0 : i32
    %c0_i32_0 = arith.constant 0 : i32
    %c0_i32_1 = arith.constant 0 : i32
    return %arg0, %arg1, %c0_i32, %c0_i32_0 : i32, i32, i32, i32
  }
}

</mosaic_0001>

<llo_original>
// kernel: tpu_custom_call.1
$region0: #{tpu_custom_call.1}
  #allocation0 [shape = 'u32[]', space=smem, size = 0x4, offset = 0x4, fixed_abs, tag = 'smem constant byte address 0x4 - core index']
  #allocation1 [shape = 'u32[144,128]{1,0:T(1,128)}', space=vmem, size = 0x12000, scoped, tag = 'internal scratch']
  %s0 = inlined_call_operand.hbm [shape: f32[2,64,64], index: 0, kind: input, shape index: {}]
  %s1 = inlined_call_operand.hbm [shape: f32[4,64], index: 1, kind: input, shape index: {}]
  %s2 = inlined_call_operand.hbm [shape: f32[2,4,64], index: 2, kind: output, shape index: {0}]
  %s3 = inlined_call_operand.vmem [shape: f32[2,1,4,1], index: 3, kind: output, shape index: {1}]
  %s4 = inlined_call_operand.vmem [shape: f32[2,1,4,1], index: 4, kind: output, shape index: {2}]
  %5 = xla_tuple %s2, %s3, %s4
  %s6 = sld [smem:[#allocation0]]
  $region69: #{tpu_custom_call.1} parent=0
    _
  %s8 = ssub.s32 1, %s6
  %s9 = scalar_select 0, %s8, %s6
  $region1: #{tpu_custom_call.1} parent=0
    #allocation2 [shape = 'u8[65536]{0}', space=vmem, size = 0x10000, scoped, tag = 'input window, operand 0']
    #allocation3 [shape = 's32[2]{0}', space=sflag, size = 0x8, scoped, tag = 'scoped memory for tpu_custom_call.1']
    #allocation4 [shape = 's32[2]{0}', space=sflag, size = 0x8, scoped, tag = 'scoped memory for tpu_custom_call.1']
    #allocation5 [shape = 'u8[2048]{0}', space=vmem, size = 0x800, scoped, tag = 'input window, operand 1, single buffered']
    #allocation6 [shape = 's32[1]{0}', space=sflag, size = 0x4, scoped, tag = 'scoped memory for tpu_custom_call.1']
    #allocation7 [shape = 'u8[4096]{0}', space=vmem, size = 0x1000, scoped, tag = 'output window, operand 0']
    %10 = vsyncpa [#allocation3], 0
    %s11 = scalar_lea.sflag [#allocation3], 1
    %12 = vsyncpa %s11, 0
    %13 = vsyncpa [#allocation6], 0
    %14 = vsyncpa [#allocation4], 0
    %s15 = scalar_lea.sflag [#allocation4], 1
    %16 = vsyncpa %s15, 0
    loop: start=0, step=1, limit=4
    $region2: #{tpu_custom_call.1} parent=1 // loop_pre_header
      _
    $region3: #{tpu_custom_call.1} parent=1 // loop_header
      %s18 = sphi 0, %s22
      %p19 = scmp.ge.s32.totalorder %s18, 4
      %s25 = sphi 0, %s44
      %s26 = sphi 0, %s40
      %s27 = sphi 0, %s36
      %s28 = sphi 0, %s25
      %s29 = sphi 0, %s26
      %s30 = sphi 0, %s27
      %s31 = sphi 0, %s28
      %s32 = sphi 0, %s29
      %s33 = sphi 0, %s30
      %s51 = sphi 0, %s53
      %s54 = sphi 0, %s51
      %s55 = sphi 0, %s54
      %s71 = sphi 0, %s55
      %s75 = sphi 0, %s75
      %s77 = sphi 0, %s75
      %s78 = sphi 0, %s77
      %s92 = sphi 0, %s78
      %s102 = sphi 0, %s104
      %s105 = sphi 0, %s102
      %s106 = sphi 0, %s105
      %s122 = sphi 0, %s106
      %s130 = sphi 0, %s132
      %s133 = sphi 0, %s130
      %s134 = sphi 0, %s133
      %s150 = sphi 0, %s134
      %s158 = sphi 0, %s160
      %s161 = sphi 0, %s158
      %s162 = sphi 0, %s161
      %s178 = sphi 0, %s162
    $region4: #{tpu_custom_call.1} parent=1 // loop_header_branch
      %21 = sbr.rel (%p19) target = $region8
    $region5: #{tpu_custom_call.1} parent=1 // loop_body
      %s23 = ssub.s32 %s18, 1
      %s24 = ssub.s32 %s18, 2
      %s34 = sadd.s32 1, %s27
      %p35 = scmp.ge.s32.totalorder %s34, 1
      %s36 = scalar_select %p35, 0, %s34
      %s37 = sadd.s32 1, %s26
      %s38 = scalar_select %p35, %s37, %s26
      %p39 = scmp.ge.s32.totalorder %s38, 1
      %s40 = scalar_select %p39, 0, %s38
      %s41 = sadd.s32 1, %s25
      %s42 = scalar_select %p39, %s41, %s25
      %p43 = scmp.ge.s32.totalorder %s42, 2
      %s44 = scalar_select %p43, 0, %s42
      %s45 = sadd.s32 %s26, %s27
      %s46 = sadd.s32 %s40, %s36
      %s47 = ssub.s32 %s25, %s44
      %s48 = ssub.s32 %s45, %s46
      %s49 = sor.u32 %s47, %s48
      %p50 = scmp.eq.s32.totalorder %s49, 0
      %s52 = sadd.s32 %s51, 1
      %s53 = scalar_select %p50, %s51, %s52
      %p56 = pneg %p50
      %p57 = scmp.eq.s32.totalorder %s18, 1
      %p58 = por %p56, %p57
      %p59 = scmp.ne.s32.totalorder %s51, %s54
      %p60 = scmp.eq.s32.totalorder %s18, 0
      %p61 = por %p59, %p60
      %p62 = scmp.ne.s32.totalorder %s51, %s54
      %p63 = scmp.eq.s32.totalorder %s23, 1
      %p64 = por %p62, %p63
      %p65 = scmp.ne.s32.totalorder %s54, %s55
      %p66 = scmp.eq.s32.totalorder %s23, 0
      %p67 = por %p65, %p66
      %p68 = scmp.ne.s32.totalorder %s54, %s55
      %p69 = scmp.eq.s32.totalorder %s24, 1
      %p70 = por %p68, %p69
      %p72 = scmp.ne.s32.totalorder %s55, %s71
      %p73 = scmp.eq.s32.totalorder %s24, 0
      %p74 = por %p72, %p73
      %s76 = sadd.s32 %s75, 1
      %p79 = scmp.eq.s32.totalorder %s18, 1
      %p80 = scmp.ne.s32.totalorder %s75, %s77
      %p81 = scmp.eq.s32.totalorder %s18, 0
      %p82 = por %p80, %p81
      %p83 = scmp.ne.s32.totalorder %s75, %s77
      %p84 = scmp.eq.s32.totalorder %s23, 1
      %p85 = por %p83, %p84
      %p86 = scmp.ne.s32.totalorder %s77, %s78
      %p87 = scmp.eq.s32.totalorder %s23, 0
      %p88 = por %p86, %p87
      %p89 = scmp.ne.s32.totalorder %s77, %s78
      %p90 = scmp.eq.s32.totalorder %s24, 1
      %p91 = por %p89, %p90
      %p93 = scmp.ne.s32.totalorder %s78, %s92
      %p94 = scmp.eq.s32.totalorder %s24, 0
      %p95 = por %p93, %p94
      %s96 = sadd.s32 %s26, %s27
      %s97 = sadd.s32 %s40, %s36
      %s98 = ssub.s32 %s25, %s44
      %s99 = ssub.s32 %s96, %s97
      %s100 = sor.u32 %s98, %s99
      %p101 = scmp.eq.s32.totalorder %s100, 0
      %s103 = sadd.s32 %s102, 1
      %s104 = scalar_select %p101, %s102, %s103
      %p107 = pneg %p101
      %p108 = scmp.eq.s32.totalorder %s18, 1
      %p109 = por %p107, %p108
      %p110 = scmp.ne.s32.totalorder %s102, %s105
      %p111 = scmp.eq.s32.totalorder %s18, 0
      %p112 = por %p110, %p111
      %p113 = scmp.ne.s32.totalorder %s102, %s105
      %p114 = scmp.eq.s32.totalorder %s23, 1
      %p115 = por %p113, %p114
      %p116 = scmp.ne.s32.totalorder %s105, %s106
      %p117 = scmp.eq.s32.totalorder %s23, 0
      %p118 = por %p116, %p117
      %p119 = scmp.ne.s32.totalorder %s105, %s106
      %p120 = scmp.eq.s32.totalorder %s24, 1
      %p121 = por %p119, %p120
      %p123 = scmp.ne.s32.totalorder %s106, %s122
      %p124 = scmp.eq.s32.totalorder %s24, 0
      %p125 = por %p123, %p124
      %s126 = ssub.s32 %s25, %s44
      %s127 = ssub.s32 %s26, %s40
      %s128 = sor.u32 %s126, %s127
      %p129 = scmp.eq.s32.totalorder %s128, 0
      %s131 = sadd.s32 %s130, 1
      %s132 = scalar_select %p129, %s130, %s131
      %p135 = pneg %p129
      %p136 = scmp.eq.s32.totalorder %s18, 1
      %p137 = por %p135, %p136
      %p138 = scmp.ne.s32.totalorder %s130, %s133
      %p139 = scmp.eq.s32.totalorder %s18, 0
      %p140 = por %p138, %p139
      %p141 = scmp.ne.s32.totalorder %s130, %s133
      %p142 = scmp.eq.s32.totalorder %s23, 1
      %p143 = por %p141, %p142
      %p144 = scmp.ne.s32.totalorder %s133, %s134
      %p145 = scmp.eq.s32.totalorder %s23, 0
      %p146 = por %p144, %p145
      %p147 = scmp.ne.s32.totalorder %s133, %s134
      %p148 = scmp.eq.s32.totalorder %s24, 1
      %p149 = por %p147, %p148
      %p151 = scmp.ne.s32.totalorder %s134, %s150
      %p152 = scmp.eq.s32.totalorder %s24, 0
      %p153 = por %p151, %p152
      %s154 = ssub.s32 %s25, %s44
      %s155 = ssub.s32 %s26, %s40
      %s156 = sor.u32 %s154, %s155
      %p157 = scmp.eq.s32.totalorder %s156, 0
      %s159 = sadd.s32 %s158, 1
      %s160 = scalar_select %p157, %s158, %s159
      %p163 = pneg %p157
      %p164 = scmp.eq.s32.totalorder %s18, 1
      %p165 = por %p163, %p164
      %p166 = scmp.ne.s32.totalorder %s158, %s161
      %p167 = scmp.eq.s32.totalorder %s18, 0
      %p168 = por %p166, %p167
      %p169 = scmp.ne.s32.totalorder %s158, %s161
      %p170 = scmp.eq.s32.totalorder %s23, 1
      %p171 = por %p169, %p170
      %p172 = scmp.ne.s32.totalorder %s161, %s162
      %p173 = scmp.eq.s32.totalorder %s23, 0
      %p174 = por %p172, %p173
      %p175 = scmp.ne.s32.totalorder %s161, %s162
      %p176 = scmp.eq.s32.totalorder %s24, 1
      %p177 = por %p175, %p176
      %p179 = scmp.ne.s32.totalorder %s162, %s178
      %p180 = scmp.eq.s32.totalorder %s24, 0
      %p181 = por %p179, %p180
      %p182 = scmp.le.s32.totalorder 1, %s18
      %p183 = scmp.lt.s32.totalorder %s18, 3
      %p184 = pnand %p182, %p183
      %p185 = pneg %p184
      // Predicated region
      $region9: #{tpu_custom_call.1} parent=5 // pred_check
        _
      $region10: #{tpu_custom_call.1} parent=5 // pred_check_branch
        %187 = sbr.rel (%p184) target = $region12
      $region11: #{tpu_custom_call.1} parent=5 // pred_region
        %s188 = ssub.s32 %s18, 1
        // Predicated region
        $region13: #{tpu_custom_call.1} parent=11 // pred_check
          %p189 = pneg %p88
        $region14: #{tpu_custom_call.1} parent=11 // pred_check_branch
          %191 = sbr.rel (%p189) target = $region16
        $region15: #{tpu_custom_call.1} parent=11 // pred_region
          %s193 = ssub.s32 64, 64
          %194 = vsyncadd [#allocation6], %s193
          %s196 = sshll.u32 [#allocation5], 4
          %s197 = int_to_ptr.vmem [resolvable:$true] %s196
          %199 = dma.hbm_to_vmem [thread:$0]  %s1, 64, %s197, [#allocation6]
        $region16: #{tpu_custom_call.1} parent=11 // pred_fallthru
          _
      $region12: #{tpu_custom_call.1} parent=5 // pred_fallthru
        _
      %p200 = scmp.lt.s32.totalorder %s18, 2
      // Predicated region
      $region17: #{tpu_custom_call.1} parent=5 // pred_check
        %p201 = pneg %p200
      $region18: #{tpu_custom_call.1} parent=5 // pred_check_branch
        %203 = sbr.rel (%p201) target = $region20
      $region19: #{tpu_custom_call.1} parent=5 // pred_region
        // Predicated region
        $region21: #{tpu_custom_call.1} parent=19 // pred_check
          %p204 = pneg %p61
        $region22: #{tpu_custom_call.1} parent=19 // pred_check_branch
          %206 = sbr.rel (%p204) target = $region24
        $region23: #{tpu_custom_call.1} parent=19 // pred_region
          %s207 = sand.u32 %s51, 1
          %s208 = scalar_lea.sflag [#allocation3], %s207
          %s209 = sand.u32 %s51, 1
          %s210 = smul.addr %s209, 64
          %s211 = scalar_lea.vmem [#allocation2], %s210
          %s212 = sadd.s32 %s26, %s27
          %s214 = ssub.s32 1024, 1024
          %215 = vsyncadd %s208, %s214
          %s216 = smul.addr %s25, 8
          %s217 = sadd.s32 %s212, %s216
          %s218 = smul.addr %s217, 128
          %s219 = scalar_lea.hbm %s0, %s218
          %s220 = sshll.u32 %s211, 4
          %s221 = int_to_ptr.vmem [resolvable:$true] %s220
          %226 = dma.hbm_to_vmem [thread:$0]  %s219, 1024, %s221, %s208, 128, 128, 8
        $region24: #{tpu_custom_call.1} parent=19 // pred_fallthru
          _
      $region20: #{tpu_custom_call.1} parent=5 // pred_fallthru
        _
      %p227 = scmp.le.s32.totalorder 1, %s18
      %p228 = scmp.lt.s32.totalorder %s18, 3
      %p229 = pnand %p227, %p228
      %p230 = pneg %p229
      // Predicated region
      $region25: #{tpu_custom_call.1} parent=5 // pred_check
        _
      $region26: #{tpu_custom_call.1} parent=5 // pred_check_branch
        %232 = sbr.rel (%p229) target = $region28
      $region27: #{tpu_custom_call.1} parent=5 // pred_region
        %s233 = ssub.s32 %s18, 1
        %s234 = sand.u32 %s54, 1
        %s235 = scalar_lea.sflag [#allocation3], %s234
        %s236 = sand.u32 %s54, 1
        %s237 = smul.addr %s236, 64
        %s238 = scalar_lea.vmem [#allocation2], %s237
        // Predicated region
        $region29: #{tpu_custom_call.1} parent=27 // pred_check
          %p239 = pneg %p67
        $region30: #{tpu_custom_call.1} parent=27 // pred_check_branch
          %241 = sbr.rel (%p239) target = $region32
        $region31: #{tpu_custom_call.1} parent=27 // pred_region
          %242 = dma.done %s235, 1024
        $region32: #{tpu_custom_call.1} parent=27 // pred_fallthru
          _
        // Predicated region
        $region33: #{tpu_custom_call.1} parent=27 // pred_check
          %p243 = pneg %p88
        $region34: #{tpu_custom_call.1} parent=27 // pred_check_branch
          %245 = sbr.rel (%p243) target = $region36
        $region35: #{tpu_custom_call.1} parent=27 // pred_region
          %246 = dma.done [#allocation6], 64
        $region36: #{tpu_custom_call.1} parent=27 // pred_fallthru
          _
        %s247 = sand.u32 %s54, 1
        %s248 = scalar_lea.sflag [#allocation3], %s247
        %s249 = sand.u32 %s54, 1
        %s250 = smul.addr %s249, 64
        %s251 = scalar_lea.vmem [#allocation2], %s250
        %p252 = pneg %p67
        %p253 = pneg %p64
        %p254 = pneg %p88
        %p255 = pneg %p85
        %p256 = pneg %p118
        %p257 = pneg %p115
        %s258 = sand.u32 %s105, 1
        %s259 = scalar_lea.sflag [#allocation4], %s258
        %s260 = sand.u32 %s105, 1
        %s261 = smul.addr %s260, 4
        %s262 = scalar_lea.vmem [#allocation7], %s261
        %p263 = pneg %p146
        %p264 = pneg %p143
        %p265 = scmp.lt.s32.totalorder %s28, 1
        %s266 = scalar_select %p265, %s28, 1
        %p267 = scmp.lt.s32.totalorder %s29, 0
        %s268 = scalar_select %p267, %s29, 0
        %s269 = sadd.s32 %s268, %s266
        %s270 = smul.addr %s269, 4
        %s271 = scalar_lea.vmem %s3, %s270
        %p272 = pneg %p174
        %p273 = pneg %p171
        %p274 = scmp.lt.s32.totalorder %s28, 1
        %s275 = scalar_select %p274, %s28, 1
        %p276 = scmp.lt.s32.totalorder %s29, 0
        %s277 = scalar_select %p276, %s29, 0
        %s278 = sadd.s32 %s277, %s275
        %s279 = smul.addr %s278, 4
        %s280 = scalar_lea.vmem %s4, %s279
        %s281 = sadd.s32 %s29, %s30
        %s282 = sadd.s32 %s29, %s30
        %p283 = scmp.lt.s32.totalorder %s28, 1
        %s284 = scalar_select %p283, %s28, 1
        %p285 = scmp.lt.s32.totalorder %s29, 0
        %s286 = scalar_select %p285, %s29, 0
        %s287 = sadd.s32 %s286, %s284
        %s288 = smul.addr %s287, 4
        %s289 = scalar_lea.vmem %s3, %s288
        %p290 = scmp.lt.s32.totalorder %s28, 1
        %s291 = scalar_select %p290, %s28, 1
        %p292 = scmp.lt.s32.totalorder %s29, 0
        %s293 = scalar_select %p292, %s29, 0
        %s294 = sadd.s32 %s293, %s291
        %s295 = smul.addr %s294, 4
        %s296 = scalar_lea.vmem %s4, %s295
        %v297 = vld [vmem:[#allocation5] sm:$0xf]
        %v298 = vld [vmem:[%s238] sm:$0xff]
        %v299 = vld [vmem:[%s238 + $0x8] sm:$0xff]
        %v300 = vld [vmem:[%s238 + $0x10] sm:$0xff]
        %v301 = vld [vmem:[%s238 + $0x18] sm:$0xff]
        %v302 = vld [vmem:[%s238 + $0x20] sm:$0xff]
        %v303 = vld [vmem:[%s238 + $0x28] sm:$0xff]
        %v304 = vld [vmem:[%s238 + $0x30] sm:$0xff]
        %v305 = vld [vmem:[%s238 + $0x38] sm:$0xff]
        %vm306 = vcmask 523264
        %v308 = vsel %vm306, %v297, 0
        %310 = vmatprep.subr.mxu0 0.0
        %311 = vmatpush1.msra.mxu0 %v298
        %312 = vmatprep.subr.mxu0 0.0
        %313 = vmatpush1.msra.mxu0 %v299
        %314 = vmatprep.subr.mxu0 0.0
        %315 = vmatpush1.msra.mxu0 %v300
        %316 = vmatprep.subr.mxu0 0.0
        %317 = vmatpush1.msra.mxu0 %v301
        %318 = vmatprep.subr.mxu0 0.0
        %319 = vmatpush1.msra.mxu0 %v302
        %320 = vmatprep.subr.mxu0 0.0
        %321 = vmatpush1.msra.mxu0 %v303
        %322 = vmatprep.subr.mxu0 0.0
        %323 = vmatpush1.msra.mxu0 %v304
        %324 = vmatprep.subr.mxu0 0.0
        %325 = vmatpush1.msra.mxu0 %v305
        %326 = vmatprep.subr.mxu0 0.0
        %327 = vmatpush1.msra.mxu0 0.0
        %328 = vmatprep.subr.mxu0 0.0
        %329 = vmatpush1.msra.mxu0 0.0
        %330 = vmatprep.subr.mxu0 0.0
        %331 = vmatpush1.msra.mxu0 0.0
        %332 = vmatprep.subr.mxu0 0.0
        %333 = vmatpush1.msra.mxu0 0.0
        %334 = vmatprep.subr.mxu0 0.0
        %335 = vmatpush1.msra.mxu0 0.0
        %336 = vmatprep.subr.mxu0 0.0
        %337 = vmatpush1.msra.mxu0 0.0
        %338 = vmatprep.subr.mxu0 0.0
        %339 = vmatpush1.msra.mxu0 0.0
        %340 = vmatprep.subr.mxu0 0.0
        %341 = vmatpush1.msra.mxu0 0.0
        %342 = vmatprep.subr.mxu0 0.0
        %343 = vmatpush1.msra.mxu0 0.0
        %344 = vmatprep.subr.mxu0 0.0
        %345 = vmatpush1.msra.mxu0 0.0
        %346 = vmatprep.subr.mxu0 0.0
        %347 = vmatpush1.msra.mxu0 0.0
        %348 = vmatprep.subr.mxu0 0.0
        %349 = vmatpush1.msra.mxu0 0.0
        %350 = vmatprep.subr.mxu0 0.0
        %351 = vmatpush1.msra.mxu0 0.0
        %352 = vmatprep.subr.mxu0 0.0
        %353 = vmatpush1.msra.mxu0 0.0
        %354 = vmatprep.subr.mxu0 0.0
        %355 = vmatpush1.msra.mxu0 0.0
        %356 = vmatprep.subr.mxu0 0.0
        %357 = vmatpush1.msra.mxu0 0.0
        %358 = vmatprep.subr.mxu0 0.0
        %359 = vmatpush1.msra.mxu0 0.0
        %360 = vmatprep.subr.mxu0 0.0
        %361 = vmatpush1.msra.mxu0 0.0
        %362 = vmatprep.subr.mxu0 0.0
        %363 = vmatpush1.msra.mxu0 0.0
        %364 = vmatprep.subr.mxu0 0.0
        %365 = vmatpush1.msra.mxu0 0.0
        %366 = vmatprep.subr.mxu0 0.0
        %367 = vmatpush1.msra.mxu0 0.0
        %368 = vmatprep.subr.mxu0 0.0
        %369 = vmatpush1.msra.mxu0 0.0
        %370 = vmatprep.subr.mxu0 0.0
        %371 = vmatpush1.msra.mxu0 0.0
        %372 = vmatprep.subr.mxu0 0.0
        %373 = vmatpush1.msra.mxu0 0.0
        %374 = vmatprep.mubr.f32.mxu0 0.0
        %375 = vmatmul.mubr.f32.gmra.mrb[0].mxu0 %v308
        %v376 = vpop.f32.mrb[0].mxu0
        %v377 = vadd.f32 0.0, %v376
        %v378 = vpop.f32.mrb[0].mxu0
        %379 = vdwg.mxu0
        %vm380 = vcmask 519168
        %381 = vst.msk [vmem:[%s262] sm:$0xf] %vm380, %v377
        %p382 = scmp.eq.s32.totalorder %s30, 0
        // Predicated region
        $region37: #{tpu_custom_call.1} parent=27 // pred_check
          %p383 = pneg %p382
        $region38: #{tpu_custom_call.1} parent=27 // pred_check_branch
          %385 = sbr.rel (%p383) target = $region40
        $region39: #{tpu_custom_call.1} parent=27 // pred_region
          %vm386 = vcmask 3072
          %387 = vst.msk [vmem:[%s289] sm:$0xf] %vm386, 0.0
          %388 = vst.msk [vmem:[%s296] sm:$0xf] %vm386, 0.0
        $region40: #{tpu_custom_call.1} parent=27 // pred_fallthru
          _
        %v389 = vld [vmem:[%s289] sm:$0xf]
        %v390 = vsel %vm380, %v377, 0.0
        %391 = vadd.xlane.f32.xlu0 %v390
        %v392 = vpop.xlane.xlu0 %391
        %v393 = vadd.f32 %v389, %v392
        %vm394 = vcmask 3072
        %395 = vst.msk [vmem:[%s289] sm:$0xf] %vm394, %v393
        %v396 = vld [vmem:[%s296] sm:$0xf]
        %v397 = vmul.f32 %v377, %v377
        %v398 = vsel %vm380, %v397, 0.0
        %399 = vadd.xlane.f32.xlu0 %v398
        %v400 = vpop.xlane.xlu0 %399
        %v401 = vadd.f32 %v396, %v400
        %402 = vst.msk [vmem:[%s296] sm:$0xf] %vm394, %v401
        %s403 = sand.u32 %s105, 1
        %s404 = scalar_lea.sflag [#allocation4], %s403
        %s405 = sand.u32 %s105, 1
        %s406 = smul.addr %s405, 4
        %s407 = scalar_lea.vmem [#allocation7], %s406
        %p408 = scmp.lt.s32.totalorder %s28, 1
        %s409 = scalar_select %p408, %s28, 1
        %p410 = scmp.lt.s32.totalorder %s29, 0
        %s411 = scalar_select %p410, %s29, 0
        %s412 = sadd.s32 %s411, %s409
        %s413 = smul.addr %s412, 4
        %s414 = scalar_lea.vmem %s3, %s413
        %p415 = scmp.lt.s32.totalorder %s28, 1
        %s416 = scalar_select %p415, %s28, 1
        %p417 = scmp.lt.s32.totalorder %s29, 0
        %s418 = scalar_select %p417, %s29, 0
        %s419 = sadd.s32 %s418, %s416
        %s420 = smul.addr %s419, 4
        %s421 = scalar_lea.vmem %s4, %s420
        // Predicated region
        $region41: #{tpu_custom_call.1} parent=27 // pred_check
          %p422 = pneg %p115
        $region42: #{tpu_custom_call.1} parent=27 // pred_check_branch
          %424 = sbr.rel (%p422) target = $region44
        $region43: #{tpu_custom_call.1} parent=27 // pred_region
          %s425 = sadd.s32 %s29, %s30
          %s427 = ssub.s32 64, 64
          %428 = vsyncadd %s404, %s427
          %s429 = sadd.s32 %s425, %s28
          %s430 = smul.addr %s429, 64
          %s431 = scalar_lea.hbm %s2, %s430
          %s433 = sshll.u32 %s407, 4
          %s434 = int_to_ptr.vmem [resolvable:$true] %s433
          %436 = dma.vmem_to_hbm [thread:$0]  %s434, 64, %s431, %s404
        $region44: #{tpu_custom_call.1} parent=27 // pred_fallthru
          _
        // Predicated region
        $region45: #{tpu_custom_call.1} parent=27 // pred_check
          %p437 = pneg %p143
        $region46: #{tpu_custom_call.1} parent=27 // pred_check_branch
          %439 = sbr.rel (%p437) target = $region48
        $region47: #{tpu_custom_call.1} parent=27 // pred_region
          _
        $region48: #{tpu_custom_call.1} parent=27 // pred_fallthru
          _
        // Predicated region
        $region49: #{tpu_custom_call.1} parent=27 // pred_check
          %p440 = pneg %p171
        $region50: #{tpu_custom_call.1} parent=27 // pred_check_branch
          %442 = sbr.rel (%p440) target = $region52
        $region51: #{tpu_custom_call.1} parent=27 // pred_region
          _
        $region52: #{tpu_custom_call.1} parent=27 // pred_fallthru
          _
      $region28: #{tpu_custom_call.1} parent=5 // pred_fallthru
        _
      %p443 = scmp.le.s32.totalorder 2, %s18
      // Predicated region
      $region53: #{tpu_custom_call.1} parent=5 // pred_check
        %p444 = pneg %p443
      $region54: #{tpu_custom_call.1} parent=5 // pred_check_branch
        %446 = sbr.rel (%p444) target = $region56
      $region55: #{tpu_custom_call.1} parent=5 // pred_region
        %s447 = ssub.s32 %s18, 2
        // Predicated region
        $region57: #{tpu_custom_call.1} parent=55 // pred_check
          %p448 = pneg %p121
        $region58: #{tpu_custom_call.1} parent=55 // pred_check_branch
          %450 = sbr.rel (%p448) target = $region60
        $region59: #{tpu_custom_call.1} parent=55 // pred_region
          %s451 = sand.u32 %s106, 1
          %s452 = scalar_lea.sflag [#allocation4], %s451
          %s453 = sand.u32 %s106, 1
          %s454 = smul.addr %s453, 4
          %s455 = scalar_lea.vmem [#allocation7], %s454
          %456 = dma.done %s452, 64
        $region60: #{tpu_custom_call.1} parent=55 // pred_fallthru
          _
        // Predicated region
        $region61: #{tpu_custom_call.1} parent=55 // pred_check
          %p457 = pneg %p149
        $region62: #{tpu_custom_call.1} parent=55 // pred_check_branch
          %459 = sbr.rel (%p457) target = $region64
        $region63: #{tpu_custom_call.1} parent=55 // pred_region
          %p460 = scmp.lt.s32.totalorder %s31, 1
          %s461 = scalar_select %p460, %s31, 1
          %p462 = scmp.lt.s32.totalorder %s32, 0
          %s463 = scalar_select %p462, %s32, 0
          %s464 = sadd.s32 %s463, %s461
          %s465 = smul.addr %s464, 4
          %s466 = scalar_lea.vmem %s3, %s465
        $region64: #{tpu_custom_call.1} parent=55 // pred_fallthru
          _
        // Predicated region
        $region65: #{tpu_custom_call.1} parent=55 // pred_check
          %p467 = pneg %p177
        $region66: #{tpu_custom_call.1} parent=55 // pred_check_branch
          %469 = sbr.rel (%p467) target = $region68
        $region67: #{tpu_custom_call.1} parent=55 // pred_region
          %p470 = scmp.lt.s32.totalorder %s31, 1
          %s471 = scalar_select %p470, %s31, 1
          %p472 = scmp.lt.s32.totalorder %s32, 0
          %s473 = scalar_select %p472, %s32, 0
          %s474 = sadd.s32 %s473, %s471
          %s475 = smul.addr %s474, 4
          %s476 = scalar_lea.vmem %s4, %s475
        $region68: #{tpu_custom_call.1} parent=55 // pred_fallthru
          _
      $region56: #{tpu_custom_call.1} parent=5 // pred_fallthru
        _
    $region6: #{tpu_custom_call.1} parent=1 // loop_footer
      %s22 = sadd.s32 1, %s18
    $region7: #{tpu_custom_call.1} parent=1 // loop_footer_branch
      %17 = sbr.rel target = $region3
    $region8: #{tpu_custom_call.1} parent=1 // loop_exit
      _
    %477 = vsyncpa [#allocation3], 1
    %s478 = scalar_lea.sflag [#allocation3], 1
    %479 = vsyncpa %s478, 1
    %480 = vsyncpa [#allocation6], 1
    %481 = vsyncpa [#allocation4], 1
    %s482 = scalar_lea.sflag [#allocation4], 1
    %483 = vsyncpa %s482, 1

</llo_original>
